<compile_context>
chip_gen: v6e
topology: v6e:2x2x1
jax: 0.10.0
libtpu: 0.0.40
codegen_flags: <defaults>
</compile_context>

<pallas_src>
import functools

import jax
import jax.numpy as jnp
from jax.experimental import pallas as pl
from jax.experimental.pallas import tpu as pltpu


def _master_kernel(num_models, d_out,
                   sync_ref,    # SMEM (num_models,) int32  [scalar prefetch]
                   x_ref,       # VMEM (tm, tk)  bf16
                   w_all_ref,   # VMEM (tk, C)   bf16  (all sub-model weights, col-concat)
                   b_all_ref,   # VMEM (1, C)    f32
                   w_eff_ref,   # VMEM (C, C)    bf16  (folded crossover weight)
                   b_eff_ref,   # VMEM (1, C)    f32
                   y_ref,       # VMEM (tm, C)   f32   out
                   fb_ref,      # VMEM (1, 8, C) f32   out (per-tile column sums)
                   acc_ref):    # VMEM (tm, C)   f32   scratch
    k = pl.program_id(1)

    @pl.when(k == 0)
    def _init():
        acc_ref[...] = jnp.zeros_like(acc_ref)

    # MXU: bf16 x bf16 -> f32, accumulated over the K (D_in) grid axis.
    acc_ref[...] += jnp.dot(x_ref[...], w_all_ref[...],
                            preferred_element_type=jnp.float32)

    @pl.when(k == pl.num_programs(1) - 1)
    def _epilogue():
        z = acc_ref[...] + b_all_ref[...]                 # (tm, C) f32

        # Per-model activation, scalar-predicated on the sync signal's parity.
        for m in range(num_models):
            lo = m * d_out
            zm = z[:, lo:lo + d_out]
            parity = sync_ref[m] % 2

            @pl.when(parity == 0)
            def _relu(zm=zm, lo=lo):
                acc_ref[:, pl.ds(lo, d_out)] = jnp.maximum(zm, 0.0)

            @pl.when(parity != 0)
            def _sigmoid(zm=zm, lo=lo):
                acc_ref[:, pl.ds(lo, d_out)] = jax.nn.sigmoid(zm)

        comb = acc_ref[...]                               # activated cat(outputs)

        # Feedback partials: sublane-reduce this batch tile to per-column sums;
        # the lane -> per-model reduction happens in the wrapper.
        col = jnp.sum(comb, axis=0, keepdims=True)        # (1, C)
        fb_ref[...] = jnp.broadcast_to(col, fb_ref.shape)

        # Crossover layer: base linear + 3 crosstalk linears folded into one.
        y = jnp.dot(comb.astype(w_eff_ref.dtype), w_eff_ref[...],
                    preferred_element_type=jnp.float32) + b_eff_ref[...]
        y_ref[...] = y.astype(y_ref.dtype)


def master_controller_forward(x, model_ws, model_bs, sync_signals,
                              cross_w, cross_b, crosstalk_w,
                              *, tm=8, tk=128):
    """Fused forward of MasterControllerWithCA.

    x:            (B, D_in) f32
    model_ws:     (num_models, D_in, d_out) f32   (x @ W layout; torch stores W.T)
    model_bs:     (num_models, d_out) f32
    sync_signals: (num_models,) int32  (produced by the ganglion)
    cross_w:      (128, 128) f32  torch Linear weight (out, in)
    cross_b:      (128,) f32
    crosstalk_w:  (3, 128, 128) f32, used as F.linear(x, W_i) == x @ W_i.T

    Returns (combined_output (B, 128) f32, feedbacks (num_models,) f32).
    """
    B, D_in = x.shape
    num_models, _, d_out = model_ws.shape
    C = num_models * d_out
    assert C == cross_w.shape[1] == crosstalk_w.shape[1]
    assert B % tm == 0 and D_in % tk == 0, "pad B / D_in to tile multiples"

    # Fold the crossover base linear + 3 crosstalk linears into one weight:
    #   y = comb @ (W_lin + sum_i W_ct[i]).T + b
    w_eff = (cross_w + crosstalk_w.sum(axis=0)).T                  # (C, C)

    # Concatenate the per-model linears so every sub-model runs in one MXU pass.
    w_all = jnp.concatenate(list(model_ws), axis=1)                # (D_in, C)
    b_all = jnp.concatenate(list(model_bs), axis=0).reshape(1, C)  # (1, C)

    # bf16 MXU operands, f32 accumulation (half the DMA bytes, full MXU rate).
    x_bf = x.astype(jnp.bfloat16)
    w_all_bf = w_all.astype(jnp.bfloat16)
    w_eff_bf = w_eff.astype(jnp.bfloat16)
    b_eff = cross_b.reshape(1, C).astype(jnp.float32)
    sync = jnp.asarray(sync_signals, dtype=jnp.int32)

    grid = (B // tm, D_in // tk)

    # Tile sizing note: per-step VMEM ~ 2 bufs * (tm*tk + tk*C) bf16 + resident
    # (C,C) weight + (tm,C) f32 acc/out.  Tiny at demo shapes.
    # TODO(synk): for production B/D_in, raise tm to 256-512 and tk to 256/512
    # (MXU-friendly on v6e/v7x) and re-derive against v7x's 64 MiB VMEM.
    grid_spec = pltpu.PrefetchScalarGridSpec(
        num_scalar_prefetch=1,
        grid=grid,
        in_specs=[
            pl.BlockSpec((tm, tk), lambda i, k, s: (i, k)),        # x
            pl.BlockSpec((tk, C), lambda i, k, s: (k, 0)),         # W_all
            pl.BlockSpec((1, C), lambda i, k, s: (0, 0)),          # b_all
            pl.BlockSpec((C, C), lambda i, k, s: (0, 0)),          # W_eff
            pl.BlockSpec((1, C), lambda i, k, s: (0, 0)),          # b_eff
        ],
        out_specs=[
            pl.BlockSpec((tm, C), lambda i, k, s: (i, 0)),         # y
            pl.BlockSpec((1, 8, C), lambda i, k, s: (i, 0, 0)),    # fb partials
        ],
        scratch_shapes=[pltpu.VMEM((tm, C), jnp.float32)],
    )

    kernel = functools.partial(_master_kernel, num_models, d_out)

    y, fb_partials = pl.pallas_call(
        kernel,
        out_shape=(
            jax.ShapeDtypeStruct((B, C), jnp.float32),
            jax.ShapeDtypeStruct((grid[0], 8, C), jnp.float32),
        ),
        grid_spec=grid_spec,
        compiler_params=pltpu.CompilerParams(
            dimension_semantics=("parallel", "arbitrary")),
    )(sync, x_bf, w_all_bf, b_all, w_eff_bf, b_eff)

    # Reduce the lane-dense partials to the per-model feedback scalars.
    col_sums = fb_partials[:, 0, :].sum(axis=0)                    # (C,)
    feedbacks = col_sums.reshape(num_models, d_out).sum(axis=1)    # (num_models,)

    # TODO(synk): ganglion.receive_feedback(...) is a host-side stateful update
    # with no Pallas equivalent; the stacked feedbacks are returned instead.
    return y, feedbacks


def _reference(x, model_ws, model_bs, sync_list, cross_w, cross_b, crosstalk_w):
    """Pure-JAX reference mirroring the kernel's bf16-operand / f32-acc math."""
    xb = x.astype(jnp.bfloat16)
    outs, fbs = [], []
    for m in range(model_ws.shape[0]):
        z = jnp.dot(xb, model_ws[m].astype(jnp.bfloat16),
                    preferred_element_type=jnp.float32) + model_bs[m][None, :]
        a = jnp.maximum(z, 0.0) if sync_list[m] % 2 == 0 else jax.nn.sigmoid(z)
        outs.append(a)
        fbs.append(jnp.sum(a))
    comb = jnp.concatenate(outs, axis=1)
    w_eff = (cross_w + crosstalk_w.sum(axis=0)).T
    y = jnp.dot(comb.astype(jnp.bfloat16), w_eff.astype(jnp.bfloat16),
                preferred_element_type=jnp.float32) + cross_b[None, :]
    return y, jnp.stack(fbs)


if __name__ == "__main__":
    B, D_in = 16, 256
    num_models, d_out = 2, 64          # concat -> 128 = crossover in_features
    num_crosstalk = 3

    key = jax.random.PRNGKey(0)
    kx, kw, kb, kcw, kcb, kct = jax.random.split(key, 6)

    x = jax.random.normal(kx, (B, D_in), dtype=jnp.float32)
    model_ws = jax.random.normal(kw, (num_models, D_in, d_out), jnp.float32) * 0.1
    model_bs = jax.random.normal(kb, (num_models, d_out), jnp.float32) * 0.1
    cross_w = jax.random.normal(kcw, (128, 128), jnp.float32) * 0.05
    cross_b = jax.random.normal(kcb, (128,), jnp.float32) * 0.05
    crosstalk_w = jax.random.normal(kct, (num_crosstalk, 128, 128), jnp.float32) * 0.1

    ok = True
    for sync_cfg in ((0, 1), (1, 2)):          # exercise both activation paths
        y, fb = master_controller_forward(
            x, model_ws, model_bs, jnp.array(sync_cfg, dtype=jnp.int32),
            cross_w, cross_b, crosstalk_w)
        y = jax.block_until_ready(y)
        fb = jax.block_until_ready(fb)

        y_ref, fb_ref = _reference(x, model_ws, model_bs, sync_cfg,
                                   cross_w, cross_b, crosstalk_w)
        ok &= bool(jnp.allclose(y, y_ref, atol=5e-3, rtol=5e-3))
        ok &= bool(jnp.allclose(fb, fb_ref, atol=5e-2, rtol=1e-3))

    print("KERNEL_OK" if ok else "MISMATCH")
</pallas_src>

<mosaic_0001>
module attributes {stable_mosaic.version = 11 : i64} {
  func.func @_master_kernel(%arg0: i32, %arg1: i32, %arg2: memref<2xi32, #tpu.memory_space<smem>>, %arg3: memref<8x128xbf16, #tpu.memory_space<vmem>>, %arg4: memref<128x128xbf16, #tpu.memory_space<vmem>>, %arg5: memref<1x128xf32, #tpu.memory_space<vmem>>, %arg6: memref<128x128xbf16, #tpu.memory_space<vmem>>, %arg7: memref<1x128xf32, #tpu.memory_space<vmem>>, %arg8: memref<8x128xf32, #tpu.memory_space<vmem>>, %arg9: memref<1x8x128xf32, #tpu.memory_space<vmem>>, %arg10: memref<8x128xf32, #tpu.memory_space<vmem>>) attributes {dimension_semantics = [#tpu.dimension_semantics<parallel>, #tpu.dimension_semantics<arbitrary>], iteration_bounds = array<i64: 2, 2>, scalar_prefetch = 1 : i64, scratch_operands = 1 : i64, tpu.core_type = #tpu.core_type<tc>, window_params = [{transform_indices = @transform_0, window_bounds = array<i64: 8, 128>}, {transform_indices = @transform_1, window_bounds = array<i64: 128, 128>}, {pipeline_mode = #tpu.pipeline_mode<synchronous>, transform_indices = @transform_2, window_bounds = array<i64: 1, 128>}, {pipeline_mode = #tpu.pipeline_mode<synchronous>, transform_indices = @transform_3, window_bounds = array<i64: 128, 128>}, {pipeline_mode = #tpu.pipeline_mode<synchronous>, transform_indices = @transform_4, window_bounds = array<i64: 1, 128>}, {transform_indices = @transform_5, window_bounds = array<i64: 8, 128>}, {transform_indices = @transform_6, window_bounds = array<i64: 1, 8, 128>}]} {
    %c0_i32 = arith.constant 0 : i32
    %0 = arith.cmpi eq, %arg1, %c0_i32 : i32
    %1 = arith.extui %0 : i1 to i32
    %c0_i32_0 = arith.constant 0 : i32
    %2 = arith.cmpi ne, %1, %c0_i32_0 : i32
    scf.if %2 {
      %cst_9 = arith.constant 0.000000e+00 : f32
      %12 = vector.broadcast %cst_9 : f32 to vector<8x128xf32>
      %c0_10 = arith.constant 0 : index
      %c0_11 = arith.constant 0 : index
      %13 = vector.load %arg10[%c0_10, %c0_11] : memref<8x128xf32, #tpu.memory_space<vmem>>, vector<8x128xf32>
      tpu.vector_store %arg10[%c0_10, %c0_11], %12 {strides = array<i32>} : memref<8x128xf32, #tpu.memory_space<vmem>>, vector<8x128xf32>,
    } else {
    }
    %c0 = arith.constant 0 : index
    %c0_1 = arith.constant 0 : index
    %3 = vector.load %arg10[%c0, %c0_1] : memref<8x128xf32, #tpu.memory_space<vmem>>, vector<8x128xf32>
    %c0_2 = arith.constant 0 : index
    %c0_3 = arith.constant 0 : index
    %4 = vector.load %arg3[%c0_2, %c0_3] : memref<8x128xbf16, #tpu.memory_space<vmem>>, vector<8x128xbf16>
    %c0_4 = arith.constant 0 : index
    %c0_5 = arith.constant 0 : index
    %5 = vector.load %arg4[%c0_4, %c0_5] : memref<128x128xbf16, #tpu.memory_space<vmem>>, vector<128x128xbf16>
    %cst = arith.constant dense<0.000000e+00> : vector<8x128xf32>
    %6 = tpu.matmul %4, %5, %cst {dimension_numbers = #tpu.dot_dimension_numbers<[1], [0], [0], [1], [0, 0, 1, 1], [], []>} : vector<8x128xbf16>, vector<128x128xbf16>, vector<8x128xf32> -> vector<8x128xf32>
    %7 = arith.addf %3, %6 : vector<8x128xf32>
    %c0_6 = arith.constant 0 : index
    %c0_7 = arith.constant 0 : index
    %8 = vector.load %arg10[%c0_6, %c0_7] : memref<8x128xf32, #tpu.memory_space<vmem>>, vector<8x128xf32>
    tpu.vector_store %arg10[%c0_6, %c0_7], %7 {strides = array<i32>} : memref<8x128xf32, #tpu.memory_space<vmem>>, vector<8x128xf32>,
    %c1_i32 = arith.constant 1 : i32
    %9 = arith.cmpi eq, %arg1, %c1_i32 : i32
    %10 = arith.extui %9 : i1 to i32
    %c0_i32_8 = arith.constant 0 : i32
    %11 = arith.cmpi ne, %10, %c0_i32_8 : i32
    scf.if %11 {
      %c0_9 = arith.constant 0 : index
      %c0_10 = arith.constant 0 : index
      %12 = vector.load %arg10[%c0_9, %c0_10] : memref<8x128xf32, #tpu.memory_space<vmem>>, vector<8x128xf32>
      %c0_11 = arith.constant 0 : index
      %c0_12 = arith.constant 0 : index
      %13 = vector.load %arg5[%c0_11, %c0_12] : memref<1x128xf32, #tpu.memory_space<vmem>>, vector<1x128xf32>
      %14 = vector.broadcast %13 : vector<1x128xf32> to vector<8x128xf32>
      %15 = arith.addf %12, %14 : vector<8x128xf32>
      %16 = vector.extract_strided_slice %15 {offsets = [0, 0], sizes = [8, 64], strides = [1, 1]} : vector<8x128xf32> to vector<8x64xf32>
      %c0_13 = arith.constant 0 : index
      %17 = memref.load %arg2[%c0_13] : memref<2xi32, #tpu.memory_space<smem>>
      %c2_i32 = arith.constant 2 : i32
      %c0_i32_14 = arith.constant 0 : i32
      %18 = arith.cmpi eq, %c2_i32, %c0_i32_14 : i32
      %c1_i32_15 = arith.constant 1 : i32
      %19 = arith.select %18, %c1_i32_15, %c2_i32 : i32
      %20 = arith.remsi %17, %19 : i32
      %c0_i32_16 = arith.constant 0 : i32
      %21 = arith.cmpi ne, %20, %c0_i32_16 : i32
      %c0_i32_17 = arith.constant 0 : i32
      %22 = arith.cmpi slt, %20, %c0_i32_17 : i32
      %c0_i32_18 = arith.constant 0 : i32
      %23 = arith.cmpi slt, %19, %c0_i32_18 : i32
      %24 = arith.xori %22, %23 : i1
      %25 = arith.andi %24, %21 : i1
      %26 = arith.addi %20, %19 : i32
      %27 = arith.select %25, %26, %20 : i32
      %c0_i32_19 = arith.constant 0 : i32
      %28 = arith.cmpi eq, %27, %c0_i32_19 : i32
      %29 = arith.extui %28 : i1 to i32
      %c0_i32_20 = arith.constant 0 : i32
      %30 = arith.cmpi ne, %29, %c0_i32_20 : i32
      scf.if %30 {
        %cst_46 = arith.constant 0.000000e+00 : f32
        %65 = vector.broadcast %cst_46 : f32 to vector<8x64xf32>
        %66 = arith.maximumf %16, %65 : vector<8x64xf32>
        %c0_47 = arith.constant 0 : index
        %c0_48 = arith.constant 0 : index
        %67 = vector.load %arg10[%c0_47, %c0_48] : memref<8x128xf32, #tpu.memory_space<vmem>>, vector<8x64xf32>
        tpu.vector_store %arg10[%c0_47, %c0_48], %66 {strides = array<i32>} : memref<8x128xf32, #tpu.memory_space<vmem>>, vector<8x64xf32>,
      } else {
      }
      %c0_i32_21 = arith.constant 0 : i32
      %31 = arith.cmpi ne, %27, %c0_i32_21 : i32
      %32 = arith.extui %31 : i1 to i32
      %c0_i32_22 = arith.constant 0 : i32
      %33 = arith.cmpi ne, %32, %c0_i32_22 : i32
      scf.if %33 {
        %65 = arith.negf %16 : vector<8x64xf32>
        %66 = math.exp %65 : vector<8x64xf32>
        %cst_46 = arith.constant 1.000000e+00 : f32
        %67 = vector.broadcast %cst_46 : f32 to vector<8x64xf32>
        %68 = arith.addf %67, %66 : vector<8x64xf32>
        %69 = arith.divf %67, %68 : vector<8x64xf32>
        %c0_47 = arith.constant 0 : index
        %c0_48 = arith.constant 0 : index
        %70 = vector.load %arg10[%c0_47, %c0_48] : memref<8x128xf32, #tpu.memory_space<vmem>>, vector<8x64xf32>
        tpu.vector_store %arg10[%c0_47, %c0_48], %69 {strides = array<i32>} : memref<8x128xf32, #tpu.memory_space<vmem>>, vector<8x64xf32>,
      } else {
      }
      %34 = vector.extract_strided_slice %15 {offsets = [0, 64], sizes = [8, 64], strides = [1, 1]} : vector<8x128xf32> to vector<8x64xf32>
      %c1 = arith.constant 1 : index
      %35 = memref.load %arg2[%c1] : memref<2xi32, #tpu.memory_space<smem>>
      %c2_i32_23 = arith.constant 2 : i32
      %c0_i32_24 = arith.constant 0 : i32
      %36 = arith.cmpi eq, %c2_i32_23, %c0_i32_24 : i32
      %c1_i32_25 = arith.constant 1 : i32
      %37 = arith.select %36, %c1_i32_25, %c2_i32_23 : i32
      %38 = arith.remsi %35, %37 : i32
      %c0_i32_26 = arith.constant 0 : i32
      %39 = arith.cmpi ne, %38, %c0_i32_26 : i32
      %c0_i32_27 = arith.constant 0 : i32
      %40 = arith.cmpi slt, %38, %c0_i32_27 : i32
      %c0_i32_28 = arith.constant 0 : i32
      %41 = arith.cmpi slt, %37, %c0_i32_28 : i32
      %42 = arith.xori %40, %41 : i1
      %43 = arith.andi %42, %39 : i1
      %44 = arith.addi %38, %37 : i32
      %45 = arith.select %43, %44, %38 : i32
      %c0_i32_29 = arith.constant 0 : i32
      %46 = arith.cmpi eq, %45, %c0_i32_29 : i32
      %47 = arith.extui %46 : i1 to i32
      %c0_i32_30 = arith.constant 0 : i32
      %48 = arith.cmpi ne, %47, %c0_i32_30 : i32
      scf.if %48 {
        %cst_46 = arith.constant 0.000000e+00 : f32
        %65 = vector.broadcast %cst_46 : f32 to vector<8x64xf32>
        %66 = arith.maximumf %34, %65 : vector<8x64xf32>
        %c0_47 = arith.constant 0 : index
        %c64 = arith.constant 64 : index
        %67 = vector.load %arg10[%c0_47, %c64] : memref<8x128xf32, #tpu.memory_space<vmem>>, vector<8x64xf32>
        tpu.vector_store %arg10[%c0_47, %c64], %66 {strides = array<i32>} : memref<8x128xf32, #tpu.memory_space<vmem>>, vector<8x64xf32>,
      } else {
      }
      %c0_i32_31 = arith.constant 0 : i32
      %49 = arith.cmpi ne, %45, %c0_i32_31 : i32
      %50 = arith.extui %49 : i1 to i32
      %c0_i32_32 = arith.constant 0 : i32
      %51 = arith.cmpi ne, %50, %c0_i32_32 : i32
      scf.if %51 {
        %65 = arith.negf %34 : vector<8x64xf32>
        %66 = math.exp %65 : vector<8x64xf32>
        %cst_46 = arith.constant 1.000000e+00 : f32
        %67 = vector.broadcast %cst_46 : f32 to vector<8x64xf32>
        %68 = arith.addf %67, %66 : vector<8x64xf32>
        %69 = arith.divf %67, %68 : vector<8x64xf32>
        %c0_47 = arith.constant 0 : index
        %c64 = arith.constant 64 : index
        %70 = vector.load %arg10[%c0_47, %c64] : memref<8x128xf32, #tpu.memory_space<vmem>>, vector<8x64xf32>
        tpu.vector_store %arg10[%c0_47, %c64], %69 {strides = array<i32>} : memref<8x128xf32, #tpu.memory_space<vmem>>, vector<8x64xf32>,
      } else {
      }
      %c0_33 = arith.constant 0 : index
      %c0_34 = arith.constant 0 : index
      %52 = vector.load %arg10[%c0_33, %c0_34] : memref<8x128xf32, #tpu.memory_space<vmem>>, vector<8x128xf32>
      %cst_35 = arith.constant dense<0.000000e+00> : vector<128xf32>
      %53 = vector.multi_reduction <add>, %52, %cst_35 [0] : vector<8x128xf32> to vector<128xf32>
      %54 = vector.shape_cast %53 : vector<128xf32> to vector<1x128xf32>
      %55 = vector.shape_cast %54 : vector<1x128xf32> to vector<1x1x128xf32>
      %56 = vector.broadcast %55 : vector<1x1x128xf32> to vector<1x8x128xf32>
      %c0_36 = arith.constant 0 : index
      %c0_37 = arith.constant 0 : index
      %c0_38 = arith.constant 0 : index
      %57 = vector.load %arg9[%c0_36, %c0_37, %c0_38] : memref<1x8x128xf32, #tpu.memory_space<vmem>>, vector<1x8x128xf32>
      tpu.vector_store %arg9[%c0_36, %c0_37, %c0_38], %56 {strides = array<i32>} : memref<1x8x128xf32, #tpu.memory_space<vmem>>, vector<1x8x128xf32>,
      %58 = arith.truncf %52 : vector<8x128xf32> to vector<8x128xbf16>
      %c0_39 = arith.constant 0 : index
      %c0_40 = arith.constant 0 : index
      %59 = vector.load %arg6[%c0_39, %c0_40] : memref<128x128xbf16, #tpu.memory_space<vmem>>, vector<128x128xbf16>
      %cst_41 = arith.constant dense<0.000000e+00> : vector<8x128xf32>
      %60 = tpu.matmul %58, %59, %cst_41 {dimension_numbers = #tpu.dot_dimension_numbers<[1], [0], [0], [1], [0, 0, 1, 1], [], []>} : vector<8x128xbf16>, vector<128x128xbf16>, vector<8x128xf32> -> vector<8x128xf32>
      %c0_42 = arith.constant 0 : index
      %c0_43 = arith.constant 0 : index
      %61 = vector.load %arg7[%c0_42, %c0_43] : memref<1x128xf32, #tpu.memory_space<vmem>>, vector<1x128xf32>
      %62 = vector.broadcast %61 : vector<1x128xf32> to vector<8x128xf32>
      %63 = arith.addf %60, %62 : vector<8x128xf32>
      %c0_44 = arith.constant 0 : index
      %c0_45 = arith.constant 0 : index
      %64 = vector.load %arg8[%c0_44, %c0_45] : memref<8x128xf32, #tpu.memory_space<vmem>>, vector<8x128xf32>
      tpu.vector_store %arg8[%c0_44, %c0_45], %63 {strides = array<i32>} : memref<8x128xf32, #tpu.memory_space<vmem>>, vector<8x128xf32>,
    } else {
    }
    return
  }
  func.func @transform_0(%arg0: i32, %arg1: i32, %arg2: memref<2xi32, #tpu.memory_space<smem>>) -> (i32, i32) {
    %c0_i32 = arith.constant 0 : i32
    return %arg0, %arg1 : i32, i32
  }
  func.func @transform_1(%arg0: i32, %arg1: i32, %arg2: memref<2xi32, #tpu.memory_space<smem>>) -> (i32, i32) {
    %c0_i32 = arith.constant 0 : i32
    %c0_i32_0 = arith.constant 0 : i32
    return %arg1, %c0_i32 : i32, i32
  }
  func.func @transform_2(%arg0: i32, %arg1: i32, %arg2: memref<2xi32, #tpu.memory_space<smem>>) -> (i32, i32) {
    %c0_i32 = arith.constant 0 : i32
    %c0_i32_0 = arith.constant 0 : i32
    %c0_i32_1 = arith.constant 0 : i32
    return %c0_i32, %c0_i32_0 : i32, i32
  }
  func.func @transform_3(%arg0: i32, %arg1: i32, %arg2: memref<2xi32, #tpu.memory_space<smem>>) -> (i32, i32) {
    %c0_i32 = arith.constant 0 : i32
    %c0_i32_0 = arith.constant 0 : i32
    %c0_i32_1 = arith.constant 0 : i32
    return %c0_i32, %c0_i32_0 : i32, i32
  }
  func.func @transform_4(%arg0: i32, %arg1: i32, %arg2: memref<2xi32, #tpu.memory_space<smem>>) -> (i32, i32) {
    %c0_i32 = arith.constant 0 : i32
    %c0_i32_0 = arith.constant 0 : i32
    %c0_i32_1 = arith.constant 0 : i32
    return %c0_i32, %c0_i32_0 : i32, i32
  }
  func.func @transform_5(%arg0: i32, %arg1: i32, %arg2: memref<2xi32, #tpu.memory_space<smem>>) -> (i32, i32) {
    %c0_i32 = arith.constant 0 : i32
    %c0_i32_0 = arith.constant 0 : i32
    return %arg0, %c0_i32 : i32, i32
  }
  func.func @transform_6(%arg0: i32, %arg1: i32, %arg2: memref<2xi32, #tpu.memory_space<smem>>) -> (i32, i32, i32) {
    %c0_i32 = arith.constant 0 : i32
    %c0_i32_0 = arith.constant 0 : i32
    %c0_i32_1 = arith.constant 0 : i32
    return %arg0, %c0_i32, %c0_i32_0 : i32, i32, i32
  }
}

</mosaic_0001>

<llo_original>
// kernel: tpu_custom_call.1
$region0: #{tpu_custom_call.1}
  #allocation0 [shape = 'u32[]', space=smem, size = 0x4, offset = 0x4, fixed_abs, tag = 'smem constant byte address 0x4 - core index']
  #allocation1 [shape = 'u32[144,128]{1,0:T(1,128)}', space=vmem, size = 0x12000, scoped, tag = 'internal scratch']
  #allocation2 [shape = 'f32[8,128]{1,0:T(8,128)}', space=vmem, size = 0x1000, scoped, tag = 'scratch operand']
  #allocation3 [shape = 's32[1]{0}', space=sflag, size = 0x4, scoped, tag = 'scoped memory for tpu_custom_call.1']
  #allocation4 [shape = 'u8[512]{0}', space=smem, size = 0x200, scoped, tag = 'prefetched SMEM operand 0']
  %s0 = inlined_call_operand.hbm [shape: s32[2], index: 0, kind: input, shape index: {}]
  %s1 = inlined_call_operand.hbm [shape: bf16[16,256], index: 1, kind: input, shape index: {}]
  %s2 = inlined_call_operand.hbm [shape: bf16[256,128], index: 2, kind: input, shape index: {}]
  %s3 = inlined_call_operand.vmem [shape: f32[1,128], index: 3, kind: input, shape index: {}]
  %s4 = inlined_call_operand.hbm [shape: bf16[128,128], index: 4, kind: input, shape index: {}]
  %s5 = inlined_call_operand.vmem [shape: f32[1,128], index: 5, kind: input, shape index: {}]
  %s6 = inlined_call_operand.hbm [shape: f32[16,128], index: 6, kind: output, shape index: {0}]
  %s7 = inlined_call_operand.hbm [shape: f32[2,8,128], index: 7, kind: output, shape index: {1}]
  %8 = xla_tuple %s6, %s7
  %s9 = sld [smem:[#allocation0]]
  $region97: #{tpu_custom_call.1} parent=0
    _
  %s11 = ssub.s32 1, %s9
  %s12 = scalar_select 0, %s11, %s9
  %14 = dma.hbm_to_smem %s0, 16, [#allocation4], [#allocation3]
  %15 = dma.done [#allocation3], 16
  %16 = sfence
  $region1: #{tpu_custom_call.1} parent=0
    #allocation5 [shape = 'u8[4096]{0}', space=vmem, size = 0x1000, scoped, tag = 'input window, operand 1']
    #allocation6 [shape = 's32[2]{0}', space=sflag, size = 0x8, scoped, tag = 'scoped memory for tpu_custom_call.1']
    #allocation7 [shape = 's32[2]{0}', space=sflag, size = 0x8, scoped, tag = 'scoped memory for tpu_custom_call.1']
    #allocation8 [shape = 'u8[65536]{0}', space=vmem, size = 0x10000, scoped, tag = 'input window, operand 2']
    #allocation9 [shape = 's32[2]{0}', space=sflag, size = 0x8, scoped, tag = 'scoped memory for tpu_custom_call.1']
    #allocation10 [shape = 'u8[32768]{0}', space=vmem, size = 0x8000, scoped, tag = 'input window, operand 4, single buffered']
    #allocation11 [shape = 'u8[8192]{0}', space=vmem, size = 0x2000, scoped, tag = 'output window, operand 0']
    #allocation12 [shape = 'u8[8192]{0}', space=vmem, size = 0x2000, scoped, tag = 'output window, operand 1']
    #allocation13 [shape = 's32[2]{0}', space=sflag, size = 0x8, scoped, tag = 'scoped memory for tpu_custom_call.1']
    %17 = vsyncpa [#allocation6], 0
    %s18 = scalar_lea.sflag [#allocation6], 1
    %19 = vsyncpa %s18, 0
    %20 = vsyncpa [#allocation9], 0
    %s21 = scalar_lea.sflag [#allocation9], 1
    %22 = vsyncpa %s21, 0
    %23 = vsyncpa [#allocation7], 0
    %s24 = scalar_lea.sflag [#allocation7], 1
    %25 = vsyncpa %s24, 0
    %26 = vsyncpa [#allocation13], 0
    %s27 = scalar_lea.sflag [#allocation13], 1
    %28 = vsyncpa %s27, 0
    loop: start=0, step=1, limit=6
    $region2: #{tpu_custom_call.1} parent=1 // loop_pre_header
      _
    $region3: #{tpu_custom_call.1} parent=1 // loop_header
      %s30 = sphi 0, %s34
      %p31 = scmp.ge.s32.totalorder %s30, 6
      %s37 = sphi 0, %s49
      %s38 = sphi 0, %s45
      %s39 = sphi 0, %s37
      %s40 = sphi 0, %s38
      %s41 = sphi 0, %s39
      %s42 = sphi 0, %s40
      %s54 = sphi 0, %s56
      %s57 = sphi 0, %s54
      %s58 = sphi 0, %s57
      %s74 = sphi 0, %s58
      %s80 = sphi 0, %s82
      %s83 = sphi 0, %s80
      %s84 = sphi 0, %s83
      %s100 = sphi 0, %s84
      %s104 = sphi 0, %s104
      %s106 = sphi 0, %s104
      %s107 = sphi 0, %s106
      %s121 = sphi 0, %s107
      %s125 = sphi 0, %s125
      %s127 = sphi 0, %s125
      %s128 = sphi 0, %s127
      %s142 = sphi 0, %s128
      %s146 = sphi 0, %s146
      %s148 = sphi 0, %s146
      %s149 = sphi 0, %s148
      %s163 = sphi 0, %s149
      %s169 = sphi 0, %s171
      %s172 = sphi 0, %s169
      %s173 = sphi 0, %s172
      %s189 = sphi 0, %s173
      %s195 = sphi 0, %s197
      %s198 = sphi 0, %s195
      %s199 = sphi 0, %s198
      %s215 = sphi 0, %s199
    $region4: #{tpu_custom_call.1} parent=1 // loop_header_branch
      %33 = sbr.rel (%p31) target = $region8
    $region5: #{tpu_custom_call.1} parent=1 // loop_body
      %s35 = ssub.s32 %s30, 1
      %s36 = ssub.s32 %s30, 2
      %s43 = sadd.s32 1, %s38
      %p44 = scmp.ge.s32.totalorder %s43, 2
      %s45 = scalar_select %p44, 0, %s43
      %s46 = sadd.s32 1, %s37
      %s47 = scalar_select %p44, %s46, %s37
      %p48 = scmp.ge.s32.totalorder %s47, 2
      %s49 = scalar_select %p48, 0, %s47
      %s50 = ssub.s32 %s37, %s49
      %s51 = ssub.s32 %s38, %s45
      %s52 = sor.u32 %s50, %s51
      %p53 = scmp.eq.s32.totalorder %s52, 0
      %s55 = sadd.s32 %s54, 1
      %s56 = scalar_select %p53, %s54, %s55
      %p59 = pneg %p53
      %p60 = scmp.eq.s32.totalorder %s30, 3
      %p61 = por %p59, %p60
      %p62 = scmp.ne.s32.totalorder %s54, %s57
      %p63 = scmp.eq.s32.totalorder %s30, 0
      %p64 = por %p62, %p63
      %p65 = scmp.ne.s32.totalorder %s54, %s57
      %p66 = scmp.eq.s32.totalorder %s35, 3
      %p67 = por %p65, %p66
      %p68 = scmp.ne.s32.totalorder %s57, %s58
      %p69 = scmp.eq.s32.totalorder %s35, 0
      %p70 = por %p68, %p69
      %p71 = scmp.ne.s32.totalorder %s57, %s58
      %p72 = scmp.eq.s32.totalorder %s36, 3
      %p73 = por %p71, %p72
      %p75 = scmp.ne.s32.totalorder %s58, %s74
      %p76 = scmp.eq.s32.totalorder %s36, 0
      %p77 = por %p75, %p76
      %s78 = ssub.s32 %s38, %s45
      %p79 = scmp.eq.s32.totalorder %s78, 0
      %s81 = sadd.s32 %s80, 1
      %s82 = scalar_select %p79, %s80, %s81
      %p85 = pneg %p79
      %p86 = scmp.eq.s32.totalorder %s30, 3
      %p87 = por %p85, %p86
      %p88 = scmp.ne.s32.totalorder %s80, %s83
      %p89 = scmp.eq.s32.totalorder %s30, 0
      %p90 = por %p88, %p89
      %p91 = scmp.ne.s32.totalorder %s80, %s83
      %p92 = scmp.eq.s32.totalorder %s35, 3
      %p93 = por %p91, %p92
      %p94 = scmp.ne.s32.totalorder %s83, %s84
      %p95 = scmp.eq.s32.totalorder %s35, 0
      %p96 = por %p94, %p95
      %p97 = scmp.ne.s32.totalorder %s83, %s84
      %p98 = scmp.eq.s32.totalorder %s36, 3
      %p99 = por %p97, %p98
      %p101 = scmp.ne.s32.totalorder %s84, %s100
      %p102 = scmp.eq.s32.totalorder %s36, 0
      %p103 = por %p101, %p102
      %s105 = sadd.s32 %s104, 1
      %p108 = scmp.eq.s32.totalorder %s30, 3
      %p109 = scmp.ne.s32.totalorder %s104, %s106
      %p110 = scmp.eq.s32.totalorder %s30, 0
      %p111 = por %p109, %p110
      %p112 = scmp.ne.s32.totalorder %s104, %s106
      %p113 = scmp.eq.s32.totalorder %s35, 3
      %p114 = por %p112, %p113
      %p115 = scmp.ne.s32.totalorder %s106, %s107
      %p116 = scmp.eq.s32.totalorder %s35, 0
      %p117 = por %p115, %p116
      %p118 = scmp.ne.s32.totalorder %s106, %s107
      %p119 = scmp.eq.s32.totalorder %s36, 3
      %p120 = por %p118, %p119
      %p122 = scmp.ne.s32.totalorder %s107, %s121
      %p123 = scmp.eq.s32.totalorder %s36, 0
      %p124 = por %p122, %p123
      %s126 = sadd.s32 %s125, 1
      %p129 = scmp.eq.s32.totalorder %s30, 3
      %p130 = scmp.ne.s32.totalorder %s125, %s127
      %p131 = scmp.eq.s32.totalorder %s30, 0
      %p132 = por %p130, %p131
      %p133 = scmp.ne.s32.totalorder %s125, %s127
      %p134 = scmp.eq.s32.totalorder %s35, 3
      %p135 = por %p133, %p134
      %p136 = scmp.ne.s32.totalorder %s127, %s128
      %p137 = scmp.eq.s32.totalorder %s35, 0
      %p138 = por %p136, %p137
      %p139 = scmp.ne.s32.totalorder %s127, %s128
      %p140 = scmp.eq.s32.totalorder %s36, 3
      %p141 = por %p139, %p140
      %p143 = scmp.ne.s32.totalorder %s128, %s142
      %p144 = scmp.eq.s32.totalorder %s36, 0
      %p145 = por %p143, %p144
      %s147 = sadd.s32 %s146, 1
      %p150 = scmp.eq.s32.totalorder %s30, 3
      %p151 = scmp.ne.s32.totalorder %s146, %s148
      %p152 = scmp.eq.s32.totalorder %s30, 0
      %p153 = por %p151, %p152
      %p154 = scmp.ne.s32.totalorder %s146, %s148
      %p155 = scmp.eq.s32.totalorder %s35, 3
      %p156 = por %p154, %p155
      %p157 = scmp.ne.s32.totalorder %s148, %s149
      %p158 = scmp.eq.s32.totalorder %s35, 0
      %p159 = por %p157, %p158
      %p160 = scmp.ne.s32.totalorder %s148, %s149
      %p161 = scmp.eq.s32.totalorder %s36, 3
      %p162 = por %p160, %p161
      %p164 = scmp.ne.s32.totalorder %s149, %s163
      %p165 = scmp.eq.s32.totalorder %s36, 0
      %p166 = por %p164, %p165
      %s167 = ssub.s32 %s37, %s49
      %p168 = scmp.eq.s32.totalorder %s167, 0
      %s170 = sadd.s32 %s169, 1
      %s171 = scalar_select %p168, %s169, %s170
      %p174 = pneg %p168
      %p175 = scmp.eq.s32.totalorder %s30, 3
      %p176 = por %p174, %p175
      %p177 = scmp.ne.s32.totalorder %s169, %s172
      %p178 = scmp.eq.s32.totalorder %s30, 0
      %p179 = por %p177, %p178
      %p180 = scmp.ne.s32.totalorder %s169, %s172
      %p181 = scmp.eq.s32.totalorder %s35, 3
      %p182 = por %p180, %p181
      %p183 = scmp.ne.s32.totalorder %s172, %s173
      %p184 = scmp.eq.s32.totalorder %s35, 0
      %p185 = por %p183, %p184
      %p186 = scmp.ne.s32.totalorder %s172, %s173
      %p187 = scmp.eq.s32.totalorder %s36, 3
      %p188 = por %p186, %p187
      %p190 = scmp.ne.s32.totalorder %s173, %s189
      %p191 = scmp.eq.s32.totalorder %s36, 0
      %p192 = por %p190, %p191
      %s193 = ssub.s32 %s37, %s49
      %p194 = scmp.eq.s32.totalorder %s193, 0
      %s196 = sadd.s32 %s195, 1
      %s197 = scalar_select %p194, %s195, %s196
      %p200 = pneg %p194
      %p201 = scmp.eq.s32.totalorder %s30, 3
      %p202 = por %p200, %p201
      %p203 = scmp.ne.s32.totalorder %s195, %s198
      %p204 = scmp.eq.s32.totalorder %s30, 0
      %p205 = por %p203, %p204
      %p206 = scmp.ne.s32.totalorder %s195, %s198
      %p207 = scmp.eq.s32.totalorder %s35, 3
      %p208 = por %p206, %p207
      %p209 = scmp.ne.s32.totalorder %s198, %s199
      %p210 = scmp.eq.s32.totalorder %s35, 0
      %p211 = por %p209, %p210
      %p212 = scmp.ne.s32.totalorder %s198, %s199
      %p213 = scmp.eq.s32.totalorder %s36, 3
      %p214 = por %p212, %p213
      %p216 = scmp.ne.s32.totalorder %s199, %s215
      %p217 = scmp.eq.s32.totalorder %s36, 0
      %p218 = por %p216, %p217
      %p219 = scmp.le.s32.totalorder 1, %s30
      %p220 = scmp.lt.s32.totalorder %s30, 5
      %p221 = pnand %p219, %p220
      %p222 = pneg %p221
      // Predicated region
      $region9: #{tpu_custom_call.1} parent=5 // pred_check
        _
      $region10: #{tpu_custom_call.1} parent=5 // pred_check_branch
        %224 = sbr.rel (%p221) target = $region12
      $region11: #{tpu_custom_call.1} parent=5 // pred_region
        %s225 = ssub.s32 %s30, 1
        // Predicated region
        $region13: #{tpu_custom_call.1} parent=11 // pred_check
          %p226 = pneg %p117
        $region14: #{tpu_custom_call.1} parent=11 // pred_check_branch
          %228 = sbr.rel (%p226) target = $region16
        $region15: #{tpu_custom_call.1} parent=11 // pred_region
          _
        $region16: #{tpu_custom_call.1} parent=11 // pred_fallthru
          _
        // Predicated region
        $region17: #{tpu_custom_call.1} parent=11 // pred_check
          %p229 = pneg %p138
        $region18: #{tpu_custom_call.1} parent=11 // pred_check_branch
          %231 = sbr.rel (%p229) target = $region20
        $region19: #{tpu_custom_call.1} parent=11 // pred_region
          %s233 = ssub.s32 1024, 1024
          %234 = vsyncadd [#allocation9], %s233
          %s235 = sshll.u32 [#allocation10], 4
          %s236 = int_to_ptr.vmem [resolvable:$true] %s235
          %241 = dma.hbm_to_vmem [thread:$0]  %s4, 1024, %s236, [#allocation9], 64, 64, 4
        $region20: #{tpu_custom_call.1} parent=11 // pred_fallthru
          _
        // Predicated region
        $region21: #{tpu_custom_call.1} parent=11 // pred_check
          %p242 = pneg %p159
        $region22: #{tpu_custom_call.1} parent=11 // pred_check_branch
          %244 = sbr.rel (%p242) target = $region24
        $region23: #{tpu_custom_call.1} parent=11 // pred_region
          _
        $region24: #{tpu_custom_call.1} parent=11 // pred_fallthru
          _
      $region12: #{tpu_custom_call.1} parent=5 // pred_fallthru
        _
      %p245 = scmp.lt.s32.totalorder %s30, 4
      // Predicated region
      $region25: #{tpu_custom_call.1} parent=5 // pred_check
        %p246 = pneg %p245
      $region26: #{tpu_custom_call.1} parent=5 // pred_check_branch
        %248 = sbr.rel (%p246) target = $region28
      $region27: #{tpu_custom_call.1} parent=5 // pred_region
        // Predicated region
        $region29: #{tpu_custom_call.1} parent=27 // pred_check
          %p249 = pneg %p64
        $region30: #{tpu_custom_call.1} parent=27 // pred_check_branch
          %251 = sbr.rel (%p249) target = $region32
        $region31: #{tpu_custom_call.1} parent=27 // pred_region
          %s252 = sand.u32 %s54, 1
          %s253 = scalar_lea.sflag [#allocation6], %s252
          %s254 = sand.u32 %s54, 1
          %s255 = smul.addr %s254, 4
          %s256 = scalar_lea.vmem [#allocation5], %s255
          %s258 = ssub.s32 64, 64
          %259 = vsyncadd %s253, %s258
          %s260 = smul.addr %s37, 2
          %s261 = sadd.s32 %s38, %s260
          %s262 = smul.addr %s261, 64
          %s263 = scalar_lea.hbm %s1, %s262
          %s265 = sshll.u32 %s256, 4
          %s266 = int_to_ptr.vmem [resolvable:$true] %s265
          %268 = dma.hbm_to_vmem [thread:$0]  %s263, 64, %s266, %s253
        $region32: #{tpu_custom_call.1} parent=27 // pred_fallthru
          _
        // Predicated region
        $region33: #{tpu_custom_call.1} parent=27 // pred_check
          %p269 = pneg %p90
        $region34: #{tpu_custom_call.1} parent=27 // pred_check_branch
          %271 = sbr.rel (%p269) target = $region36
        $region35: #{tpu_custom_call.1} parent=27 // pred_region
          %s272 = sand.u32 %s30, 1
          %s273 = scalar_lea.sflag [#allocation9], %s272
          %s274 = sand.u32 %s80, 1
          %s275 = smul.addr %s274, 64
          %s276 = scalar_lea.vmem [#allocation8], %s275
          %s277 = smul.u32 16, %s38
          %s279 = ssub.s32 1024, 1024
          %280 = vsyncadd %s273, %s279
          %s281 = smul.addr %s277, 64
          %s282 = scalar_lea.hbm %s2, %s281
          %s283 = sshll.u32 %s276, 4
          %s284 = int_to_ptr.vmem [resolvable:$true] %s283
          %289 = dma.hbm_to_vmem [thread:$0]  %s282, 1024, %s284, %s273, 64, 64, 4
        $region36: #{tpu_custom_call.1} parent=27 // pred_fallthru
          _
      $region28: #{tpu_custom_call.1} parent=5 // pred_fallthru
        _
      %p290 = scmp.le.s32.totalorder 1, %s30
      %p291 = scmp.lt.s32.totalorder %s30, 5
      %p292 = pnand %p290, %p291
      %p293 = pneg %p292
      // Predicated region
      $region37: #{tpu_custom_call.1} parent=5 // pred_check
        _
      $region38: #{tpu_custom_call.1} parent=5 // pred_check_branch
        %295 = sbr.rel (%p292) target = $region40
      $region39: #{tpu_custom_call.1} parent=5 // pred_region
        %s296 = ssub.s32 %s30, 1
        %s297 = sand.u32 %s57, 1
        %s298 = scalar_lea.sflag [#allocation6], %s297
        %s299 = sand.u32 %s57, 1
        %s300 = smul.addr %s299, 4
        %s301 = scalar_lea.vmem [#allocation5], %s300
        // Predicated region
        $region41: #{tpu_custom_call.1} parent=39 // pred_check
          %p302 = pneg %p70
        $region42: #{tpu_custom_call.1} parent=39 // pred_check_branch
          %304 = sbr.rel (%p302) target = $region44
        $region43: #{tpu_custom_call.1} parent=39 // pred_region
          %305 = dma.done %s298, 64
        $region44: #{tpu_custom_call.1} parent=39 // pred_fallthru
          _
        %s306 = sand.u32 %s35, 1
        %s307 = scalar_lea.sflag [#allocation9], %s306
        %s308 = sand.u32 %s83, 1
        %s309 = smul.addr %s308, 64
        %s310 = scalar_lea.vmem [#allocation8], %s309
        // Predicated region
        $region45: #{tpu_custom_call.1} parent=39 // pred_check
          %p311 = pneg %p96
        $region46: #{tpu_custom_call.1} parent=39 // pred_check_branch
          %313 = sbr.rel (%p311) target = $region48
        $region47: #{tpu_custom_call.1} parent=39 // pred_region
          %314 = dma.done %s307, 1024
        $region48: #{tpu_custom_call.1} parent=39 // pred_fallthru
          _
        // Predicated region
        $region49: #{tpu_custom_call.1} parent=39 // pred_check
          %p315 = pneg %p138
        $region50: #{tpu_custom_call.1} parent=39 // pred_check_branch
          %317 = sbr.rel (%p315) target = $region52
        $region51: #{tpu_custom_call.1} parent=39 // pred_region
          %318 = dma.done [#allocation9], 1024
        $region52: #{tpu_custom_call.1} parent=39 // pred_fallthru
          _
        %s319 = sand.u32 %s57, 1
        %s320 = scalar_lea.sflag [#allocation6], %s319
        %s321 = sand.u32 %s57, 1
        %s322 = smul.addr %s321, 4
        %s323 = scalar_lea.vmem [#allocation5], %s322
        %p324 = pneg %p70
        %p325 = pneg %p67
        %s326 = sand.u32 %s35, 1
        %s327 = scalar_lea.sflag [#allocation9], %s326
        %s328 = sand.u32 %s83, 1
        %s329 = smul.addr %s328, 64
        %s330 = scalar_lea.vmem [#allocation8], %s329
        %p331 = pneg %p96
        %p332 = pneg %p93
        %p333 = pneg %p117
        %p334 = pneg %p114
        %p335 = pneg %p138
        %p336 = pneg %p135
        %p337 = pneg %p159
        %p338 = pneg %p156
        %p339 = pneg %p185
        %p340 = pneg %p182
        %s341 = sand.u32 %s172, 1
        %s342 = scalar_lea.sflag [#allocation7], %s341
        %s343 = sand.u32 %s172, 1
        %s344 = smul.addr %s343, 8
        %s345 = scalar_lea.vmem [#allocation11], %s344
        %p346 = pneg %p211
        %p347 = pneg %p208
        %s348 = sand.u32 %s198, 1
        %s349 = scalar_lea.sflag [#allocation13], %s348
        %s350 = sand.u32 %s198, 1
        %s351 = smul.addr %s350, 8
        %s352 = scalar_lea.vmem [#allocation12], %s351
        %s353 = smul.u32 16, %s40
        %p355 = scmp.eq.s32.totalorder %s40, 0
        // Predicated region
        $region53: #{tpu_custom_call.1} parent=39 // pred_check
          %p356 = pneg %p355
        $region54: #{tpu_custom_call.1} parent=39 // pred_check_branch
          %358 = sbr.rel (%p356) target = $region56
        $region55: #{tpu_custom_call.1} parent=39 // pred_region
          %359 = vst [vmem:[#allocation2] sm:$0xff] 0.0
        $region56: #{tpu_custom_call.1} parent=39 // pred_fallthru
          _
        %v360 = vld [vmem:[#allocation2] sm:$0xff]
        %v361 = vld [vmem:[%s301] sm:$0xf]
        %v362 = vld [vmem:[%s310] sm:$0xf]
        %v363 = vld [vmem:[%s310 + $0x4] sm:$0xf]
        %v364 = vld [vmem:[%s310 + $0x8] sm:$0xf]
        %v365 = vld [vmem:[%s310 + $0xc] sm:$0xf]
        %v366 = vld [vmem:[%s310 + $0x10] sm:$0xf]
        %v367 = vld [vmem:[%s310 + $0x14] sm:$0xf]
        %v368 = vld [vmem:[%s310 + $0x18] sm:$0xf]
        %v369 = vld [vmem:[%s310 + $0x1c] sm:$0xf]
        %v370 = vld [vmem:[%s310 + $0x20] sm:$0xf]
        %v371 = vld [vmem:[%s310 + $0x24] sm:$0xf]
        %v372 = vld [vmem:[%s310 + $0x28] sm:$0xf]
        %v373 = vld [vmem:[%s310 + $0x2c] sm:$0xf]
        %v374 = vld [vmem:[%s310 + $0x30] sm:$0xf]
        %v375 = vld [vmem:[%s310 + $0x34] sm:$0xf]
        %v376 = vld [vmem:[%s310 + $0x38] sm:$0xf]
        %v377 = vld [vmem:[%s310 + $0x3c] sm:$0xf]
        %v394 = vunpack.c.l.b16 %v362
        %v395 = vunpack.c.l.b16 %v363
        %v396 = vunpack.c.l.b16 %v364
        %v397 = vunpack.c.l.b16 %v365
        %v398 = vunpack.c.l.b16 %v366
        %v399 = vunpack.c.l.b16 %v367
        %v400 = vunpack.c.l.b16 %v368
        %v401 = vunpack.c.l.b16 %v369
        %v402 = vunpack.c.l.b16 %v370
        %v403 = vunpack.c.l.b16 %v371
        %v404 = vunpack.c.l.b16 %v372
        %v405 = vunpack.c.l.b16 %v373
        %v406 = vunpack.c.l.b16 %v374
        %v407 = vunpack.c.l.b16 %v375
        %v408 = vunpack.c.l.b16 %v376
        %v409 = vunpack.c.l.b16 %v377
        %v410 = vpack.c.b16 %v395, %v394
        %v411 = vpack.c.b16 %v397, %v396
        %v412 = vpack.c.b16 %v399, %v398
        %v413 = vpack.c.b16 %v401, %v400
        %v414 = vpack.c.b16 %v403, %v402
        %v415 = vpack.c.b16 %v405, %v404
        %v416 = vpack.c.b16 %v407, %v406
        %v417 = vpack.c.b16 %v409, %v408
        %426 = vmatprep.subr.bf16.mxu0 0
        %427 = vmatpush1.bf16.msra.mxu0 %v417
        %428 = vmatprep.subr.bf16.mxu0 0
        %429 = vmatpush1.bf16.msra.mxu0 %v416
        %430 = vmatprep.subr.bf16.mxu0 0
        %431 = vmatpush1.bf16.msra.mxu0 %v415
        %432 = vmatprep.subr.bf16.mxu0 0
        %433 = vmatpush1.bf16.msra.mxu0 %v414
        %434 = vmatprep.subr.bf16.mxu0 0
        %435 = vmatpush1.bf16.msra.mxu0 %v413
        %436 = vmatprep.subr.bf16.mxu0 0
        %437 = vmatpush1.bf16.msra.mxu0 %v412
        %438 = vmatprep.subr.bf16.mxu0 0
        %439 = vmatpush1.bf16.msra.mxu0 %v411
        %440 = vmatprep.subr.bf16.mxu0 0
        %441 = vmatpush1.bf16.msra.mxu0 %v410
        %442 = vmatprep.subr.bf16.mxu0 0
        %443 = vmatpush2.bf16.msra.mxu0 0
        %444 = vmatprep.subr.bf16.mxu0 0
        %445 = vmatpush2.bf16.msra.mxu0 0
        %446 = vmatprep.subr.bf16.mxu0 0
        %447 = vmatpush2.bf16.msra.mxu0 0
        %448 = vmatprep.subr.bf16.mxu0 0
        %449 = vmatpush2.bf16.msra.mxu0 0
        %450 = vmatprep.subr.bf16.mxu0 0
        %451 = vmatpush2.bf16.msra.mxu0 0
        %452 = vmatprep.subr.bf16.mxu0 0
        %453 = vmatpush2.bf16.msra.mxu0 0
        %454 = vmatprep.subr.bf16.mxu0 0
        %455 = vmatpush2.bf16.msra.mxu0 0
        %456 = vmatprep.subr.bf16.mxu0 0
        %457 = vmatpush2.bf16.msra.mxu0 0
        %458 = vmatprep.mubr.bf16.mxu0 0
        %459 = vmatmul.mubr.bf16.gmra.mxu0 %v361
        %v460 = vpop.f32.mrf.mxu0
        %v461 = vadd.f32 0.0, %v460
        %v462 = vpop.f32.mrf.mxu0
        %v463 = vpop.f32.mrf.mxu0
        %v464 = vpop.f32.mrf.mxu0
        %465 = vdwg.mxu0
        %v466 = vadd.f32 %v360, %v461
        %467 = vst [vmem:[#allocation2] sm:$0xff] %v466
        %p468 = scmp.eq.s32.totalorder %s40, 1
        // Predicated region
        $region57: #{tpu_custom_call.1} parent=39 // pred_check
          %p469 = pneg %p468
        $region58: #{tpu_custom_call.1} parent=39 // pred_check_branch
          %471 = sbr.rel (%p469) target = $region60
        $region59: #{tpu_custom_call.1} parent=39 // pred_region
          %v472 = vld [vmem:[#allocation2] sm:$0xff]
          %v473 = vld [vmem:[%s3] sm:$0x1]
          %v475 = vlaneseq
          %v476 = vshrl.u32 %v475, 7
          %v477 = vsub.s32 0, %v476
          %v478 = vrot.slane %v473, %v477
          %v480 = vadd.f32 %v472, %v478
          %s481 = sld [smem:[#allocation4]]
          %p482 = scmp.lt.s32.totalorder %s481, 0
          %s483 = ssub.s32 0, %s481
          %s484 = scalar_select %p482, %s483, %s481
          %s485 = sand.u32 %s484, 1
          %s486 = ssub.s32 0, %s485
          %s487 = scalar_select %p482, %s486, %s485
          %p488 = scmp.ne.s32.totalorder %s487, 0
          %p489 = scmp.lt.s32.totalorder %s487, 0
          %p490 = pnand %p489, %p488
          %p491 = pneg %p490
          %s492 = sadd.s32 %s487, 2
          %s493 = scalar_select %p491, %s492, %s487
          %p494 = scmp.eq.s32.totalorder %s493, 0
          // Predicated region
          $region61: #{tpu_custom_call.1} parent=59 // pred_check
            %p495 = pneg %p494
          $region62: #{tpu_custom_call.1} parent=59 // pred_check_branch
            %497 = sbr.rel (%p495) target = $region64
          $region63: #{tpu_custom_call.1} parent=59 // pred_region
            %v498 = vmax.f32 %v480, 0.0
            %vm499 = vcmask 523264
            %500 = vst.msk [vmem:[#allocation2] sm:$0xff] %vm499, %v498
          $region64: #{tpu_custom_call.1} parent=59 // pred_fallthru
            _
          %p501 = scmp.ne.s32.totalorder %s493, 0
          // Predicated region
          $region65: #{tpu_custom_call.1} parent=59 // pred_check
            %p502 = pneg %p501
          $region66: #{tpu_custom_call.1} parent=59 // pred_check_branch
            %504 = sbr.rel (%p502) target = $region68
          $region67: #{tpu_custom_call.1} parent=59 // pred_region
            %v505 = vxor.u32 %v480, 2147483648
            %v506 = vmul.f32 %v505, 1.442695
            %v507 = vpow.pop %v506
            %v508 = vadd.f32 %v507, 1.0
            %v509 = vrcp.pop %v508
            %v510 = vmul.f32 1.0, %v509
            %vm511 = vcmask 523264
            %512 = vst.msk [vmem:[#allocation2] sm:$0xff] %vm511, %v510
          $region68: #{tpu_custom_call.1} parent=59 // pred_fallthru
            _
          %s513 = sld [smem:[#allocation4 + $0x1]]
          %p514 = scmp.lt.s32.totalorder %s513, 0
          %s515 = ssub.s32 0, %s513
          %s516 = scalar_select %p514, %s515, %s513
          %s517 = sand.u32 %s516, 1
          %s518 = ssub.s32 0, %s517
          %s519 = scalar_select %p514, %s518, %s517
          %p520 = scmp.ne.s32.totalorder %s519, 0
          %p521 = scmp.lt.s32.totalorder %s519, 0
          %p522 = pnand %p521, %p520
          %p523 = pneg %p522
          %s524 = sadd.s32 %s519, 2
          %s525 = scalar_select %p523, %s524, %s519
          %p526 = scmp.eq.s32.totalorder %s525, 0
          // Predicated region
          $region69: #{tpu_custom_call.1} parent=59 // pred_check
            %p527 = pneg %p526
          $region70: #{tpu_custom_call.1} parent=59 // pred_check_branch
            %529 = sbr.rel (%p527) target = $region72
          $region71: #{tpu_custom_call.1} parent=59 // pred_region
            %v530 = vmax.f32 %v480, 0.0
            %vm531 = vcmask 1048064
            %532 = vst.msk [vmem:[#allocation2] sm:$0xff] %vm531, %v530
          $region72: #{tpu_custom_call.1} parent=59 // pred_fallthru
            _
          %p533 = scmp.ne.s32.totalorder %s525, 0
          // Predicated region
          $region73: #{tpu_custom_call.1} parent=59 // pred_check
            %p534 = pneg %p533
          $region74: #{tpu_custom_call.1} parent=59 // pred_check_branch
            %536 = sbr.rel (%p534) target = $region76
          $region75: #{tpu_custom_call.1} parent=59 // pred_region
            %v537 = vxor.u32 %v480, 2147483648
            %v538 = vmul.f32 %v537, 1.442695
            %v539 = vpow.pop %v538
            %v540 = vadd.f32 %v539, 1.0
            %v541 = vrcp.pop %v540
            %v542 = vmul.f32 1.0, %v541
            %vm543 = vcmask 1048064
            %544 = vst.msk [vmem:[#allocation2] sm:$0xff] %vm543, %v542
          $region76: #{tpu_custom_call.1} parent=59 // pred_fallthru
            _
          %v545 = vld [vmem:[#allocation2] sm:$0xff]
          %v546 = vrot.slane %v545, 4
          %v547 = vadd.f32 %v545, %v546
          %v548 = vrot.slane %v547, 2
          %v549 = vadd.f32 %v547, %v548
          %v550 = vrot.slane %v549, 1
          %v551 = vadd.f32 %v549, %v550
          %552 = vst [vmem:[%s352] sm:$0xff] %v551
          %v553 = vpack.c.bf16 %v545, %v545
          %v554 = vld [vmem:[#allocation10] sm:$0xf]
          %v555 = vld [vmem:[#allocation10 + $0x4] sm:$0xf]
          %v556 = vld [vmem:[#allocation10 + $0x8] sm:$0xf]
          %v557 = vld [vmem:[#allocation10 + $0xc] sm:$0xf]
          %v558 = vld [vmem:[#allocation10 + $0x10] sm:$0xf]
          %v559 = vld [vmem:[#allocation10 + $0x14] sm:$0xf]
          %v560 = vld [vmem:[#allocation10 + $0x18] sm:$0xf]
          %v561 = vld [vmem:[#allocation10 + $0x1c] sm:$0xf]
          %v562 = vld [vmem:[#allocation10 + $0x20] sm:$0xf]
          %v563 = vld [vmem:[#allocation10 + $0x24] sm:$0xf]
          %v564 = vld [vmem:[#allocation10 + $0x28] sm:$0xf]
          %v565 = vld [vmem:[#allocation10 + $0x2c] sm:$0xf]
          %v566 = vld [vmem:[#allocation10 + $0x30] sm:$0xf]
          %v567 = vld [vmem:[#allocation10 + $0x34] sm:$0xf]
          %v568 = vld [vmem:[#allocation10 + $0x38] sm:$0xf]
          %v569 = vld [vmem:[#allocation10 + $0x3c] sm:$0xf]
          %v570 = vld [vmem:[%s5] sm:$0x1]
          %v572 = vlaneseq
          %v573 = vshrl.u32 %v572, 7
          %v574 = vsub.s32 0, %v573
          %v575 = vrot.slane %v570, %v574
          %v593 = vunpack.c.l.b16 %v554
          %v594 = vunpack.c.l.b16 %v555
          %v595 = vunpack.c.l.b16 %v556
          %v596 = vunpack.c.l.b16 %v557
          %v597 = vunpack.c.l.b16 %v558
          %v598 = vunpack.c.l.b16 %v559
          %v599 = vunpack.c.l.b16 %v560
          %v600 = vunpack.c.l.b16 %v561
          %v601 = vunpack.c.l.b16 %v562
          %v602 = vunpack.c.l.b16 %v563
          %v603 = vunpack.c.l.b16 %v564
          %v604 = vunpack.c.l.b16 %v565
          %v605 = vunpack.c.l.b16 %v566
          %v606 = vunpack.c.l.b16 %v567
          %v607 = vunpack.c.l.b16 %v568
          %v608 = vunpack.c.l.b16 %v569
          %v609 = vpack.c.b16 %v594, %v593
          %v610 = vpack.c.b16 %v596, %v595
          %v611 = vpack.c.b16 %v598, %v597
          %v612 = vpack.c.b16 %v600, %v599
          %v613 = vpack.c.b16 %v602, %v601
          %v614 = vpack.c.b16 %v604, %v603
          %v615 = vpack.c.b16 %v606, %v605
          %v616 = vpack.c.b16 %v608, %v607
          %625 = vmatprep.subr.bf16.mxu0 0
          %626 = vmatpush1.bf16.msra.mxu0 %v616
          %627 = vmatprep.subr.bf16.mxu0 0
          %628 = vmatpush1.bf16.msra.mxu0 %v615
          %629 = vmatprep.subr.bf16.mxu0 0
          %630 = vmatpush1.bf16.msra.mxu0 %v614
          %631 = vmatprep.subr.bf16.mxu0 0
          %632 = vmatpush1.bf16.msra.mxu0 %v613
          %633 = vmatprep.subr.bf16.mxu0 0
          %634 = vmatpush1.bf16.msra.mxu0 %v612
          %635 = vmatprep.subr.bf16.mxu0 0
          %636 = vmatpush1.bf16.msra.mxu0 %v611
          %637 = vmatprep.subr.bf16.mxu0 0
          %638 = vmatpush1.bf16.msra.mxu0 %v610
          %639 = vmatprep.subr.bf16.mxu0 0
          %640 = vmatpush1.bf16.msra.mxu0 %v609
          %641 = vmatprep.subr.bf16.mxu0 0
          %642 = vmatpush2.bf16.msra.mxu0 0
          %643 = vmatprep.subr.bf16.mxu0 0
          %644 = vmatpush2.bf16.msra.mxu0 0
          %645 = vmatprep.subr.bf16.mxu0 0
          %646 = vmatpush2.bf16.msra.mxu0 0
          %647 = vmatprep.subr.bf16.mxu0 0
          %648 = vmatpush2.bf16.msra.mxu0 0
          %649 = vmatprep.subr.bf16.mxu0 0
          %650 = vmatpush2.bf16.msra.mxu0 0
          %651 = vmatprep.subr.bf16.mxu0 0
          %652 = vmatpush2.bf16.msra.mxu0 0
          %653 = vmatprep.subr.bf16.mxu0 0
          %654 = vmatpush2.bf16.msra.mxu0 0
          %655 = vmatprep.subr.bf16.mxu0 0
          %656 = vmatpush2.bf16.msra.mxu0 0
          %657 = vmatprep.mubr.bf16.mxu0 0
          %658 = vmatmul.mubr.bf16.gmra.mxu0 %v553
          %v659 = vpop.f32.mrf.mxu0
          %v660 = vadd.f32 %v575, %v659
          %v661 = vpop.f32.mrf.mxu0
          %v662 = vpop.f32.mrf.mxu0
          %v663 = vpop.f32.mrf.mxu0
          %664 = vdwg.mxu0
          %665 = vst [vmem:[%s345] sm:$0xff] %v660
        $region60: #{tpu_custom_call.1} parent=39 // pred_fallthru
          _
        %s666 = sand.u32 %s172, 1
        %s667 = scalar_lea.sflag [#allocation7], %s666
        %s668 = sand.u32 %s172, 1
        %s669 = smul.addr %s668, 8
        %s670 = scalar_lea.vmem [#allocation11], %s669
        %s671 = sand.u32 %s198, 1
        %s672 = scalar_lea.sflag [#allocation13], %s671
        %s673 = sand.u32 %s198, 1
        %s674 = smul.addr %s673, 8
        %s675 = scalar_lea.vmem [#allocation12], %s674
        // Predicated region
        $region77: #{tpu_custom_call.1} parent=39 // pred_check
          %p676 = pneg %p182
        $region78: #{tpu_custom_call.1} parent=39 // pred_check_branch
          %678 = sbr.rel (%p676) target = $region80
        $region79: #{tpu_custom_call.1} parent=39 // pred_region
          %s680 = ssub.s32 128, 128
          %681 = vsyncadd %s667, %s680
          %s682 = smul.addr %s39, 128
          %s683 = scalar_lea.hbm %s6, %s682
          %s685 = sshll.u32 %s670, 4
          %s686 = int_to_ptr.vmem [resolvable:$true] %s685
          %688 = dma.vmem_to_hbm [thread:$0]  %s686, 128, %s683, %s667
        $region80: #{tpu_custom_call.1} parent=39 // pred_fallthru
          _
        // Predicated region
        $region81: #{tpu_custom_call.1} parent=39 // pred_check
          %p689 = pneg %p208
        $region82: #{tpu_custom_call.1} parent=39 // pred_check_branch
          %691 = sbr.rel (%p689) target = $region84
        $region83: #{tpu_custom_call.1} parent=39 // pred_region
          %s693 = ssub.s32 128, 128
          %694 = vsyncadd %s672, %s693
          %s695 = smul.addr %s39, 128
          %s696 = scalar_lea.hbm %s7, %s695
          %s698 = sshll.u32 %s675, 4
          %s699 = int_to_ptr.vmem [resolvable:$true] %s698
          %701 = dma.vmem_to_hbm [thread:$0]  %s699, 128, %s696, %s672
        $region84: #{tpu_custom_call.1} parent=39 // pred_fallthru
          _
      $region40: #{tpu_custom_call.1} parent=5 // pred_fallthru
        _
      %p702 = scmp.le.s32.totalorder 2, %s30
      // Predicated region
      $region85: #{tpu_custom_call.1} parent=5 // pred_check
        %p703 = pneg %p702
      $region86: #{tpu_custom_call.1} parent=5 // pred_check_branch
        %705 = sbr.rel (%p703) target = $region88
      $region87: #{tpu_custom_call.1} parent=5 // pred_region
        %s706 = ssub.s32 %s30, 2
        // Predicated region
        $region89: #{tpu_custom_call.1} parent=87 // pred_check
          %p707 = pneg %p188
        $region90: #{tpu_custom_call.1} parent=87 // pred_check_branch
          %709 = sbr.rel (%p707) target = $region92
        $region91: #{tpu_custom_call.1} parent=87 // pred_region
          %s710 = sand.u32 %s173, 1
          %s711 = scalar_lea.sflag [#allocation7], %s710
          %s712 = sand.u32 %s173, 1
          %s713 = smul.addr %s712, 8
          %s714 = scalar_lea.vmem [#allocation11], %s713
          %715 = dma.done %s711, 128
        $region92: #{tpu_custom_call.1} parent=87 // pred_fallthru
          _
        // Predicated region
        $region93: #{tpu_custom_call.1} parent=87 // pred_check
          %p716 = pneg %p214
        $region94: #{tpu_custom_call.1} parent=87 // pred_check_branch
          %718 = sbr.rel (%p716) target = $region96
        $region95: #{tpu_custom_call.1} parent=87 // pred_region
          %s719 = sand.u32 %s199, 1
          %s720 = scalar_lea.sflag [#allocation13], %s719
          %s721 = sand.u32 %s199, 1
          %s722 = smul.addr %s721, 8
          %s723 = scalar_lea.vmem [#allocation12], %s722
          %724 = dma.done %s720, 128
        $region96: #{tpu_custom_call.1} parent=87 // pred_fallthru
          _
      $region88: #{tpu_custom_call.1} parent=5 // pred_fallthru
        _
    $region6: #{tpu_custom_call.1} parent=1 // loop_footer
      %s34 = sadd.s32 1, %s30
    $region7: #{tpu_custom_call.1} parent=1 // loop_footer_branch
      %29 = sbr.rel target = $region3
    $region8: #{tpu_custom_call.1} parent=1 // loop_exit
      _
    %725 = vsyncpa [#allocation6], 1
    %s726 = scalar_lea.sflag [#allocation6], 1
    %727 = vsyncpa %s726, 1
    %728 = vsyncpa [#allocation9], 1
    %s729 = scalar_lea.sflag [#allocation9], 1
    %730 = vsyncpa %s729, 1
    %731 = vsyncpa [#allocation7], 1
    %s732 = scalar_lea.sflag [#allocation7], 1
    %733 = vsyncpa %s732, 1
    %734 = vsyncpa [#allocation13], 1
    %s735 = scalar_lea.sflag [#allocation13], 1
    %736 = vsyncpa %s735, 1

</llo_original>
